<compile_context>
chip_gen: v6e
topology: v6e:2x2x1
jax: 0.10.0
libtpu: 0.0.40
codegen_flags: <defaults>
</compile_context>

<pallas_src>
import functools

import jax
import jax.numpy as jnp
from jax import lax
from jax.experimental import pallas as pl
from jax.experimental.pallas import tpu as pltpu

_LANE = 128


def _round_up(x, m):
    return ((x + m - 1) // m) * m


def _vmem_capacity_bytes():
    """Best-effort per-generation VMEM capacity; conservative 64 MiB fallback (v7x per-TC)."""
    try:
        info = pltpu.get_tpu_info()
        cap = getattr(info, "vmem_capacity_bytes", None)
        if cap:
            return int(cap)
    except Exception:
        pass
    return 64 * 1024 * 1024


def focal_loss_kernel(x_ref, t_ref, o_ref, *, gamma, valid_rows, mask_rows):
    """One batch tile -> (1, 1, C) per-class partial sums of the UNWEIGHTED focal loss.

    alpha weighting and the final mean are hoisted to the wrapper."""
    x = x_ref[...].astype(jnp.float32)
    t = t_ref[...].astype(jnp.float32)

    # BCEWithLogitsLoss (reduction='none'), numerically stable form:
    #   bce = max(x, 0) - x*t + log(1 + exp(-|x|))
    bce = jnp.maximum(x, 0.0) - x * t + jnp.log1p(jnp.exp(-jnp.abs(x)))

    pt = jnp.exp(-bce)
    one_minus_pt = 1.0 - pt
    if gamma == 2.0:
        # Avoid lax.pow (exp+log on the single EUP slot) for the common case.
        mod = one_minus_pt * one_minus_pt
    elif float(gamma).is_integer() and 0 < gamma <= 4:
        mod = one_minus_pt
        for _ in range(int(gamma) - 1):
            mod = mod * one_minus_pt
    else:
        mod = one_minus_pt ** jnp.float32(gamma)
    focal = mod * bce

    bb, cc = focal.shape
    if mask_rows:
        # Ragged batch tail: rows past `valid_rows` hold undefined data from the
        # partial last block; zero them before the reduce (pure VPU cmp+select).
        row = lax.broadcasted_iota(jnp.int32, (bb, cc), 0) + pl.program_id(0) * bb
        focal = jnp.where(row < valid_rows, focal, 0.0)

    # Reduce the tile over the batch (sublane) axis: block_rows/8 vreg adds on
    # the VPU plus one cheap XLU cross-sublane reduce per lane column.
    o_ref[...] = jnp.sum(focal, axis=0, keepdims=True).reshape(1, 1, cc)


def enhanced_focal_loss(inputs, targets, alpha=None, gamma=2.0,
                        reduction="mean", max_tile_bytes=None):
    """Matches PyTorch EnhancedFocalLoss.forward for reduction in {'mean','sum'}.

    `inputs` / `targets` may be f32 or bf16 (compute is f32 in-kernel)."""
    B, C = inputs.shape
    assert targets.shape == (B, C)

    if reduction not in ("mean", "sum"):
        # TODO(synk): reduction='none' (per-element (B,C) output) needs an
        # elementwise-output kernel; only 'mean'/'sum' are implemented here.
        raise NotImplementedError("reduction='none' not supported by this kernel")

    itemsize = max(inputs.dtype.itemsize, targets.dtype.itemsize)
    # Packed (2-byte) dtypes pack 2 rows per sublane word: round rows to 16.
    sub = 16 if itemsize == 2 else 8

    # ---- tile sizing: fill a per-generation byte budget, then balance blocks ----
    vmem = _vmem_capacity_bytes()
    tile_cap = max_tile_bytes if max_tile_bytes is not None else vmem // 10
    vmem_limit = (vmem * 3) // 4

    c_lanes = _round_up(C, _LANE)                       # VMEM lane footprint per row
    bytes_per_row = c_lanes * itemsize
    max_rows = max(sub, (tile_cap // bytes_per_row) // sub * sub)

    if B <= max_rows:
        # Single block covering the whole batch: block dim == full array dim,
        # so no (8,128) divisibility requirement and no masking needed.
        block_rows = B
        num_blocks = 1
        mask_rows = False
    else:
        # Balance blocks so the last block wastes as little DMA as possible.
        num_blocks0 = pl.cdiv(B, max_rows)
        block_rows = _round_up(pl.cdiv(B, num_blocks0), sub)
        num_blocks = pl.cdiv(B, block_rows)
        mask_rows = (num_blocks * block_rows != B)

    kernel = functools.partial(focal_loss_kernel, gamma=gamma,
                               valid_rows=B, mask_rows=mask_rows)

    partials = pl.pallas_call(
        kernel,
        out_shape=jax.ShapeDtypeStruct((num_blocks, 1, C), jnp.float32),
        grid_spec=pltpu.PrefetchScalarGridSpec(
            num_scalar_prefetch=0,
            grid=(num_blocks,),
            in_specs=[
                pl.BlockSpec((block_rows, C), lambda i: (i, 0)),   # logits tile
                pl.BlockSpec((block_rows, C), lambda i: (i, 0)),   # targets tile
            ],
            # Lane-dense per-block partial sums; each block owns its own row -> no race.
            out_specs=pl.BlockSpec((1, 1, C), lambda i: (i, 0, 0)),
        ),
        compiler_params=pltpu.CompilerParams(
            # Independent blocks -> eligible for 2-TC sharding on v7x.
            # TODO(synk): verify in an xprof profile that the 1-D grid actually
            # splits across both v7x TensorCores; if not, switch to CORE_PARALLEL.
            dimension_semantics=("parallel",),
            vmem_limit_bytes=int(vmem_limit),
        ),
    )(inputs, targets)

    # One final cross-block / cross-lane reduce, done once in the wrapper.
    per_class = jnp.sum(partials, axis=(0, 1))                       # (C,)
    if alpha is not None:
        alpha_vec = jnp.broadcast_to(
            jnp.asarray(alpha, jnp.float32).reshape(-1), (C,))
        per_class = per_class * alpha_vec
    total = jnp.sum(per_class)

    if reduction == "mean":
        return total / jnp.float32(B * C)
    return total  # 'sum'


def _reference(inputs, targets, alpha, gamma=2.0):
    x = inputs.astype(jnp.float32)
    t = targets.astype(jnp.float32)
    bce = jnp.maximum(x, 0.0) - x * t + jnp.log1p(jnp.exp(-jnp.abs(x)))
    pt = jnp.exp(-bce)
    focal = (1.0 - pt) ** gamma * bce
    if alpha is not None:
        focal = alpha.astype(jnp.float32).reshape(1, -1) * focal
    return focal.mean()


if __name__ == "__main__":
    key = jax.random.PRNGKey(0)
    k1, k2, k3 = jax.random.split(key, 3)

    def make(B, C, dtype):
        logits = (jax.random.normal(k1, (B, C), dtype=jnp.float32) * 2.0).astype(dtype)
        targets = (jax.random.uniform(k2, (B, C)) > 0.7).astype(dtype)
        alpha = 0.5 + 0.5 * jax.random.uniform(k3, (C,), dtype=jnp.float32)
        return logits, targets, alpha

    # 1) aligned f32 (small multi-label batch: 16 examples, 128 classes)
    x, t, a = make(16, 128, jnp.float32)
    loss = jax.block_until_ready(enhanced_focal_loss(x, t, a))
    ref = _reference(x, t, a)
    assert jnp.allclose(loss, ref, rtol=1e-4, atol=1e-6), (loss, ref)

    # 2) unaligned shapes (13 rows, 37 classes) -- no wrapper-side padding path
    x, t, a = make(13, 37, jnp.float32)
    loss = jax.block_until_ready(enhanced_focal_loss(x, t, a))
    ref = _reference(x, t, a)
    assert jnp.allclose(loss, ref, rtol=1e-4, atol=1e-6), (loss, ref)

    # 3) multi-block grid with ragged batch tail (tiny forced tile to exercise masking)
    x, t, a = make(20, 128, jnp.float32)
    loss = jax.block_until_ready(
        enhanced_focal_loss(x, t, a, max_tile_bytes=8 * 128 * 4))
    ref = _reference(x, t, a)
    assert jnp.allclose(loss, ref, rtol=1e-4, atol=1e-6), (loss, ref)

    # 4) bf16 ingestion (halves HBM bytes; compute stays f32 in-kernel)
    x, t, a = make(16, 128, jnp.bfloat16)
    loss = jax.block_until_ready(enhanced_focal_loss(x, t, a))
    ref = _reference(x, t, a)
    assert jnp.allclose(loss, ref, rtol=1e-4, atol=1e-6), (loss, ref)

    print("KERNEL_OK")
</pallas_src>

<mosaic_0001>
module attributes {stable_mosaic.version = 11 : i64} {
  func.func @focal_loss_kernel(%arg0: i32, %arg1: memref<16x128xf32, #tpu.memory_space<vmem>>, %arg2: memref<16x128xf32, #tpu.memory_space<vmem>>, %arg3: memref<1x1x128xf32, #tpu.memory_space<vmem>>) attributes {dimension_semantics = [#tpu.dimension_semantics<parallel>], iteration_bounds = array<i64: 1>, scalar_prefetch = 0 : i64, scratch_operands = 0 : i64, tpu.core_type = #tpu.core_type<tc>, window_params = [{transform_indices = @transform_0, window_bounds = array<i64: 16, 128>}, {transform_indices = @transform_1, window_bounds = array<i64: 16, 128>}, {transform_indices = @transform_2, window_bounds = array<i64: 1, 1, 128>}]} {
    %c0 = arith.constant 0 : index
    %c0_0 = arith.constant 0 : index
    %0 = vector.load %arg1[%c0, %c0_0] : memref<16x128xf32, #tpu.memory_space<vmem>>, vector<16x128xf32>
    %c0_1 = arith.constant 0 : index
    %c0_2 = arith.constant 0 : index
    %1 = vector.load %arg2[%c0_1, %c0_2] : memref<16x128xf32, #tpu.memory_space<vmem>>, vector<16x128xf32>
    %cst = arith.constant 0.000000e+00 : f32
    %2 = vector.broadcast %cst : f32 to vector<16x128xf32>
    %3 = arith.maximumf %0, %2 : vector<16x128xf32>
    %4 = arith.mulf %0, %1 : vector<16x128xf32>
    %5 = arith.subf %3, %4 : vector<16x128xf32>
    %6 = math.absf %0 : vector<16x128xf32>
    %cst_3 = arith.constant 0.000000e+00 : f32
    %7 = vector.broadcast %cst_3 : f32 to vector<16x128xf32>
    %8 = arith.subf %7, %6 : vector<16x128xf32>
    %9 = math.exp %8 : vector<16x128xf32>
    %10 = math.log1p %9 : vector<16x128xf32>
    %11 = arith.addf %5, %10 : vector<16x128xf32>
    %cst_4 = arith.constant 0.000000e+00 : f32
    %12 = vector.broadcast %cst_4 : f32 to vector<16x128xf32>
    %13 = arith.subf %12, %11 : vector<16x128xf32>
    %14 = math.exp %13 : vector<16x128xf32>
    %cst_5 = arith.constant 1.000000e+00 : f32
    %15 = vector.broadcast %cst_5 : f32 to vector<16x128xf32>
    %16 = arith.subf %15, %14 : vector<16x128xf32>
    %17 = arith.mulf %16, %16 : vector<16x128xf32>
    %18 = arith.mulf %17, %11 : vector<16x128xf32>
    %cst_6 = arith.constant dense<0.000000e+00> : vector<128xf32>
    %19 = vector.multi_reduction <add>, %18, %cst_6 [0] : vector<16x128xf32> to vector<128xf32>
    %20 = vector.shape_cast %19 : vector<128xf32> to vector<1x128xf32>
    %21 = vector.shape_cast %20 : vector<1x128xf32> to vector<1x1x128xf32>
    %c0_7 = arith.constant 0 : index
    %c0_8 = arith.constant 0 : index
    %c0_9 = arith.constant 0 : index
    %22 = vector.load %arg3[%c0_7, %c0_8, %c0_9] : memref<1x1x128xf32, #tpu.memory_space<vmem>>, vector<1x1x128xf32>
    tpu.vector_store %arg3[%c0_7, %c0_8, %c0_9], %21 {strides = array<i32>} : memref<1x1x128xf32, #tpu.memory_space<vmem>>, vector<1x1x128xf32>,
    return
  }
  func.func @transform_0(%arg0: i32) -> (i32, i32) {
    %c0_i32 = arith.constant 0 : i32
    %c0_i32_0 = arith.constant 0 : i32
    return %arg0, %c0_i32 : i32, i32
  }
  func.func @transform_1(%arg0: i32) -> (i32, i32) {
    %c0_i32 = arith.constant 0 : i32
    %c0_i32_0 = arith.constant 0 : i32
    return %arg0, %c0_i32 : i32, i32
  }
  func.func @transform_2(%arg0: i32) -> (i32, i32, i32) {
    %c0_i32 = arith.constant 0 : i32
    %c0_i32_0 = arith.constant 0 : i32
    %c0_i32_1 = arith.constant 0 : i32
    return %arg0, %c0_i32, %c0_i32_0 : i32, i32, i32
  }
}

</mosaic_0001>

<llo_original>
// kernel: tpu_custom_call.1
$region0: #{tpu_custom_call.1}
  #allocation0 [shape = 'u32[]', space=smem, size = 0x4, offset = 0x4, fixed_abs, tag = 'smem constant byte address 0x4 - core index']
  #allocation1 [shape = 'u32[144,128]{1,0:T(1,128)}', space=vmem, size = 0x12000, scoped, tag = 'internal scratch']
  %s0 = inlined_call_operand.hbm [shape: f32[16,128], index: 0, kind: input, shape index: {}]
  %s1 = inlined_call_operand.hbm [shape: f32[16,128], index: 1, kind: input, shape index: {}]
  %s2 = inlined_call_operand.hbm [shape: f32[1,1,128], index: 2, kind: output, shape index: {}]
  %s3 = sld [smem:[#allocation0]]
  $region26: #{tpu_custom_call.1} parent=0
    _
  %s5 = ssub.s32 1, %s3
  %s6 = scalar_select 0, %s5, %s3
  $region1: #{tpu_custom_call.1} parent=0
    #allocation2 [shape = 'u8[8192]{0}', space=vmem, size = 0x2000, scoped, tag = 'input window, operand 0, single buffered']
    #allocation3 [shape = 's32[1]{0}', space=sflag, size = 0x4, scoped, tag = 'scoped memory for tpu_custom_call.1']
    #allocation4 [shape = 's32[1]{0}', space=sflag, size = 0x4, scoped, tag = 'scoped memory for tpu_custom_call.1']
    #allocation5 [shape = 'u8[8192]{0}', space=vmem, size = 0x2000, scoped, tag = 'input window, operand 1, single buffered']
    #allocation6 [shape = 's32[1]{0}', space=sflag, size = 0x4, scoped, tag = 'scoped memory for tpu_custom_call.1']
    #allocation7 [shape = 'u8[512]{0}', space=vmem, size = 0x400, scoped, tag = 'output window, operand 0, single buffered']
    %7 = vsyncpa [#allocation3], 0
    %8 = vsyncpa [#allocation6], 0
    %9 = vsyncpa [#allocation4], 0
    // Predicated region
    $region2: #{tpu_custom_call.1} parent=1 // pred_check
      _
    $region3: #{tpu_custom_call.1} parent=1 // pred_check_branch
      %11 = sbr.rel (0) target = $region5
    $region4: #{tpu_custom_call.1} parent=1 // pred_region
      %s13 = ssub.s32 256, 256
      %14 = vsyncadd [#allocation3], %s13
      %s15 = sshll.u32 [#allocation2], 4
      %s16 = int_to_ptr.vmem [resolvable:$true] %s15
      %21 = dma.hbm_to_vmem [thread:$0]  %s0, 256, %s16, [#allocation3], 128, 128, 8
    $region5: #{tpu_custom_call.1} parent=1 // pred_fallthru
      _
    // Predicated region
    $region6: #{tpu_custom_call.1} parent=1 // pred_check
      _
    $region7: #{tpu_custom_call.1} parent=1 // pred_check_branch
      %23 = sbr.rel (0) target = $region9
    $region8: #{tpu_custom_call.1} parent=1 // pred_region
      %s25 = ssub.s32 256, 256
      %26 = vsyncadd [#allocation6], %s25
      %s27 = sshll.u32 [#allocation5], 4
      %s28 = int_to_ptr.vmem [resolvable:$true] %s27
      %33 = dma.hbm_to_vmem [thread:$0]  %s1, 256, %s28, [#allocation6], 128, 128, 8
    $region9: #{tpu_custom_call.1} parent=1 // pred_fallthru
      _
    // Predicated region
    $region10: #{tpu_custom_call.1} parent=1 // pred_check
      _
    $region11: #{tpu_custom_call.1} parent=1 // pred_check_branch
      %35 = sbr.rel (0) target = $region13
    $region12: #{tpu_custom_call.1} parent=1 // pred_region
      %36 = dma.done [#allocation3], 256
    $region13: #{tpu_custom_call.1} parent=1 // pred_fallthru
      _
    // Predicated region
    $region14: #{tpu_custom_call.1} parent=1 // pred_check
      _
    $region15: #{tpu_custom_call.1} parent=1 // pred_check_branch
      %38 = sbr.rel (0) target = $region17
    $region16: #{tpu_custom_call.1} parent=1 // pred_region
      %39 = dma.done [#allocation6], 256
    $region17: #{tpu_custom_call.1} parent=1 // pred_fallthru
      _
    %v40 = vld [vmem:[#allocation2] sm:$0xff]
    %v41 = vld [vmem:[#allocation2 + $0x8] sm:$0xff]
    %v42 = vld [vmem:[#allocation5] sm:$0xff]
    %v43 = vld [vmem:[#allocation5 + $0x8] sm:$0xff]
    %v44 = vmax.f32 %v40, 0.0
    %v45 = vmax.f32 %v41, 0.0
    %v46 = vmul.f32 %v40, %v42
    %v47 = vmul.f32 %v41, %v43
    %v48 = vsub.f32 %v44, %v46
    %v49 = vsub.f32 %v45, %v47
    %v50 = vand.u32 2147483647, %v40
    %v51 = vand.u32 2147483647, %v41
    %v52 = vsub.f32 0.0, %v50
    %v53 = vsub.f32 0.0, %v51
    %v54 = vmul.f32 %v52, 1.442695
    %v55 = vpow.pop %v54
    %v56 = vmul.f32 %v53, 1.442695
    %v57 = vpow.pop %v56
    %v58 = vadd.f32 %v55, 1.0
    %v59 = vlog2.pop %v58
    %v60 = vmul.f32 %v59, 0.6931472
    %v61 = vmul.f32 -0.5, %v55
    %v62 = vadd.f32 %v61, 1.0
    %v63 = vmul.f32 %v62, %v55
    %v64 = vand.u32 2147483647, %v55
    %vm65 = vcmp.lt.f32.partialorder %v64, 0.0004427343
    %v66 = vsel %vm65, %v63, %v60
    %v67 = vadd.f32 %v57, 1.0
    %v68 = vlog2.pop %v67
    %v69 = vmul.f32 %v68, 0.6931472
    %v70 = vmul.f32 -0.5, %v57
    %v71 = vadd.f32 %v70, 1.0
    %v72 = vmul.f32 %v71, %v57
    %v73 = vand.u32 2147483647, %v57
    %vm74 = vcmp.lt.f32.partialorder %v73, 0.0004427343
    %v75 = vsel %vm74, %v72, %v69
    %v76 = vadd.f32 %v48, %v66
    %v77 = vadd.f32 %v49, %v75
    %v78 = vsub.f32 0.0, %v76
    %v79 = vsub.f32 0.0, %v77
    %v80 = vmul.f32 %v78, 1.442695
    %v81 = vpow.pop %v80
    %v82 = vmul.f32 %v79, 1.442695
    %v83 = vpow.pop %v82
    %v84 = vsub.f32 1.0, %v81
    %v85 = vsub.f32 1.0, %v83
    %v86 = vmul.f32 %v84, %v84
    %v87 = vmul.f32 %v85, %v85
    %v88 = vmul.f32 %v86, %v76
    %v89 = vmul.f32 %v87, %v77
    %v90 = vadd.f32 %v88, %v89
    %v91 = vrot.slane %v90, 4
    %v92 = vadd.f32 %v90, %v91
    %v93 = vrot.slane %v92, 2
    %v94 = vadd.f32 %v92, %v93
    %v95 = vrot.slane %v94, 1
    %v96 = vadd.f32 %v94, %v95
    %97 = vst [vmem:[#allocation7] sm:$0x1] %v96
    // Predicated region
    $region18: #{tpu_custom_call.1} parent=1 // pred_check
      _
    $region19: #{tpu_custom_call.1} parent=1 // pred_check_branch
      %99 = sbr.rel (0) target = $region21
    $region20: #{tpu_custom_call.1} parent=1 // pred_region
      %s101 = ssub.s32 16, 16
      %102 = vsyncadd [#allocation4], %s101
      %s104 = sshll.u32 [#allocation7], 4
      %s105 = int_to_ptr.vmem [resolvable:$true] %s104
      %107 = dma.vmem_to_hbm [thread:$0]  %s105, 16, %s2, [#allocation4]
    $region21: #{tpu_custom_call.1} parent=1 // pred_fallthru
      _
    // Predicated region
    $region22: #{tpu_custom_call.1} parent=1 // pred_check
      _
    $region23: #{tpu_custom_call.1} parent=1 // pred_check_branch
      %109 = sbr.rel (0) target = $region25
    $region24: #{tpu_custom_call.1} parent=1 // pred_region
      %110 = dma.done [#allocation4], 16
    $region25: #{tpu_custom_call.1} parent=1 // pred_fallthru
      _
    %111 = vsyncpa [#allocation3], 1
    %112 = vsyncpa [#allocation6], 1
    %113 = vsyncpa [#allocation4], 1

</llo_original>
